<compile_context>
chip_gen: v7x
topology: tpu7x:2x2x1
jax: 0.10.0
libtpu: 0.0.40
codegen_flags: <defaults>
</compile_context>

<pallas_src>
import jax
import jax.numpy as jnp
from jax.experimental import pallas as pl
from jax.experimental.pallas import tpu as pltpu

NEG_SLOPE = 0.01   # torch.nn.LeakyReLU default negative_slope
EPS = 1e-5         # InstanceNorm2d eps


def cond_conv_kernel(p_ref, w_ref, scale_ref, offset_ref, o_ref):
    """One batch element per grid step.

    p_ref      : (1, K*K*Cin, H*W)  im2col patches (lane-dense spatial)
    w_ref      : (Cout, K*K*Cin)    conv weight, reshaped from OIHW
    scale_ref  : (1, Cout, 1)       FiLM-gamma * InstanceNorm-gamma
    offset_ref : (1, Cout, 1)       FiLM-gamma * IN-beta + FiLM-beta
    o_ref      : (1, Cout, H*W)     output (channels on sublanes, spatial on lanes)
    """
    # --- Conv2d as a single MXU contraction --------------------------------
    # Conv bias is omitted: a per-channel constant cancels under InstanceNorm.
    acc = jnp.dot(w_ref[...], p_ref[0],
                  preferred_element_type=jnp.float32)            # (Cout, HW)

    # --- InstanceNorm2d: per-sample, per-channel over the spatial (lane) axis
    mean = jnp.mean(acc, axis=1, keepdims=True)                  # (Cout, 1)
    centered = acc - mean                                        # (Cout, HW)
    var = jnp.mean(centered * centered, axis=1, keepdims=True)   # (Cout, 1)

    # --- fold IN rsqrt, IN affine and FiLM into one per-channel scale/offset
    rstd_scaled = jax.lax.rsqrt(var + EPS) * scale_ref[0]        # (Cout, 1)
    y = centered * rstd_scaled + offset_ref[0]                   # one VPU FMA pass

    # --- LeakyReLU; Dropout2d(p=0.0) is the identity -------------------------
    y = jnp.where(y >= 0, y, NEG_SLOPE * y)

    o_ref[...] = y[None, :, :]


def cond_conv_block(x_nchw, conv_w, conv_b, in_w, in_b, cond, film_w, film_b,
                    *, padding=1):
    """Fused CondConvBlock forward. Input/output are NCHW like PyTorch."""
    N, Cin, H, W = x_nchw.shape
    Cout, _, K, _ = conv_w.shape
    HW = H * W
    KKC = Cin * K * K
    del conv_b  # per-channel conv bias cancels exactly under InstanceNorm

    # --- wrapper-side im2col; tap order (ci, ky, kx) matches OIHW reshape ---
    xp = jnp.pad(x_nchw,
                 ((0, 0), (0, 0), (padding, padding), (padding, padding)))
    taps = [xp[:, :, dy:dy + H, dx:dx + W].reshape(N, Cin, 1, HW)
            for dy in range(K) for dx in range(K)]
    patches = jnp.concatenate(taps, axis=2).reshape(N, KKC, HW)  # (N, KKC, HW)
    w2 = conv_w.reshape(Cout, KKC)                               # (Cout, KKC)

    # --- FiLM hoisted out of the kernel and folded with the IN affine -------
    gb = cond @ film_w + film_b[None, :]                         # (N, 2*Cout)
    gamma, beta = gb[:, :Cout], gb[:, Cout:]
    scale = (gamma * in_w[None, :])[:, :, None]                  # (N, Cout, 1)
    offset = (gamma * in_b[None, :] + beta)[:, :, None]          # (N, Cout, 1)

    out = pl.pallas_call(
        cond_conv_kernel,
        out_shape=jax.ShapeDtypeStruct((N, Cout, HW), jnp.float32),
        grid=(N,),
        in_specs=[
            pl.BlockSpec((1, KKC, HW), lambda n: (n, 0, 0)),
            pl.BlockSpec((Cout, KKC), lambda n: (0, 0)),
            pl.BlockSpec((1, Cout, 1), lambda n: (n, 0, 0)),
            pl.BlockSpec((1, Cout, 1), lambda n: (n, 0, 0)),
        ],
        out_specs=pl.BlockSpec((1, Cout, HW), lambda n: (n, 0, 0)),
        compiler_params=pltpu.CompilerParams(
            dimension_semantics=("parallel",)),
    )(patches, w2, scale, offset)

    # Lane-dense (N, Cout, H*W) -> NCHW is a pure reshape (no transpose).
    return out.reshape(N, Cout, H, W)


def reference(x, conv_w, conv_b, in_w, in_b, cond, film_w, film_b, *, padding=1):
    """Pure-JAX reference matching PyTorch semantics."""
    Cout = conv_w.shape[0]
    y = jax.lax.conv_general_dilated(
        x, conv_w, window_strides=(1, 1),
        padding=((padding, padding), (padding, padding)),
        dimension_numbers=("NCHW", "OIHW", "NCHW"))
    y = y + conv_b[None, :, None, None]
    mean = y.mean(axis=(2, 3), keepdims=True)
    var = ((y - mean) ** 2).mean(axis=(2, 3), keepdims=True)
    y = (y - mean) / jnp.sqrt(var + EPS)
    y = y * in_w[None, :, None, None] + in_b[None, :, None, None]
    gb = cond @ film_w + film_b[None, :]
    gamma, beta = gb[:, :Cout], gb[:, Cout:]
    y = gamma[:, :, None, None] * y + beta[:, :, None, None]
    y = jnp.where(y >= 0, y, NEG_SLOPE * y)
    return y


if __name__ == "__main__":
    N, Cin, Cout, H, W, E, K = 2, 4, 8, 16, 16, 32, 3

    key = jax.random.PRNGKey(0)
    k_x, k_c, k_w, k_b, k_fw, k_fb = jax.random.split(key, 6)

    x = jax.random.normal(k_x, (N, Cin, H, W), jnp.float32)
    cond = jax.random.normal(k_c, (N, E), jnp.float32)

    # Deterministic synthetic parameters (PyTorch-like shapes).
    conv_w = 0.1 * jax.random.normal(k_w, (Cout, Cin, K, K), jnp.float32)
    conv_b = 0.1 * jax.random.normal(k_b, (Cout,), jnp.float32)
    in_w = jnp.ones((Cout,), jnp.float32)     # InstanceNorm2d affine defaults
    in_b = jnp.zeros((Cout,), jnp.float32)
    film_w = 0.1 * jax.random.normal(k_fw, (E, 2 * Cout), jnp.float32)
    film_b = 0.1 * jax.random.normal(k_fb, (2 * Cout,), jnp.float32)

    out = cond_conv_block(x, conv_w, conv_b, in_w, in_b, cond, film_w, film_b)
    out = jax.block_until_ready(out)

    ref = reference(x, conv_w, conv_b, in_w, in_b, cond, film_w, film_b)
    ref = jax.block_until_ready(ref)

    assert out.shape == (N, Cout, H, W)
    assert jnp.allclose(out, ref, atol=1e-2, rtol=1e-2), (
        float(jnp.max(jnp.abs(out - ref))))

    print("KERNEL_OK")
</pallas_src>

<mosaic_0001>
module attributes {stable_mosaic.version = 11 : i64} {
  func.func @cond_conv_kernel(%arg0: i32, %arg1: memref<1x36x256xf32, #tpu.memory_space<vmem>>, %arg2: memref<8x36xf32, #tpu.memory_space<vmem>>, %arg3: memref<1x8x1xf32, #tpu.memory_space<vmem>>, %arg4: memref<1x8x1xf32, #tpu.memory_space<vmem>>, %arg5: memref<1x8x256xf32, #tpu.memory_space<vmem>>) attributes {dimension_semantics = [#tpu.dimension_semantics<parallel>], iteration_bounds = array<i64: 2>, scalar_prefetch = 0 : i64, scratch_operands = 0 : i64, tpu.core_type = #tpu.core_type<tc>, window_params = [{transform_indices = @transform_0, window_bounds = array<i64: 1, 36, 256>}, {pipeline_mode = #tpu.pipeline_mode<synchronous>, transform_indices = @transform_1, window_bounds = array<i64: 8, 36>}, {transform_indices = @transform_2, window_bounds = array<i64: 1, 8, 1>}, {transform_indices = @transform_3, window_bounds = array<i64: 1, 8, 1>}, {transform_indices = @transform_4, window_bounds = array<i64: 1, 8, 256>}]} {
    %c0 = arith.constant 0 : index
    %c0_0 = arith.constant 0 : index
    %0 = vector.load %arg2[%c0, %c0_0] : memref<8x36xf32, #tpu.memory_space<vmem>>, vector<8x36xf32>
    %c0_1 = arith.constant 0 : index
    %c0_2 = arith.constant 0 : index
    %c0_3 = arith.constant 0 : index
    %1 = vector.load %arg1[%c0_1, %c0_2, %c0_3] : memref<1x36x256xf32, #tpu.memory_space<vmem>>, vector<1x36x256xf32>
    %2 = vector.shape_cast %1 : vector<1x36x256xf32> to vector<36x256xf32>
    %cst = arith.constant dense<0.000000e+00> : vector<8x256xf32>
    %3 = tpu.matmul %0, %2, %cst {dimension_numbers = #tpu.dot_dimension_numbers<[1], [0], [0], [1], [0, 0, 1, 1], [], []>} : vector<8x36xf32>, vector<36x256xf32>, vector<8x256xf32> -> vector<8x256xf32>
    %cst_4 = arith.constant dense<0.000000e+00> : vector<8xf32>
    %4 = vector.multi_reduction <add>, %3, %cst_4 [1] : vector<8x256xf32> to vector<8xf32>
    %5 = vector.shape_cast %4 : vector<8xf32> to vector<8x1xf32>
    %cst_5 = arith.constant 2.560000e+02 : f32
    %6 = vector.broadcast %cst_5 : f32 to vector<8x1xf32>
    %7 = arith.divf %5, %6 : vector<8x1xf32>
    %8 = vector.broadcast %7 : vector<8x1xf32> to vector<8x256xf32>
    %9 = arith.subf %3, %8 : vector<8x256xf32>
    %10 = arith.mulf %9, %9 : vector<8x256xf32>
    %cst_6 = arith.constant dense<0.000000e+00> : vector<8xf32>
    %11 = vector.multi_reduction <add>, %10, %cst_6 [1] : vector<8x256xf32> to vector<8xf32>
    %12 = vector.shape_cast %11 : vector<8xf32> to vector<8x1xf32>
    %cst_7 = arith.constant 2.560000e+02 : f32
    %13 = vector.broadcast %cst_7 : f32 to vector<8x1xf32>
    %14 = arith.divf %12, %13 : vector<8x1xf32>
    %cst_8 = arith.constant 9.99999974E-6 : f32
    %15 = vector.broadcast %cst_8 : f32 to vector<8x1xf32>
    %16 = arith.addf %14, %15 : vector<8x1xf32>
    %17 = math.rsqrt %16 : vector<8x1xf32>
    %c0_9 = arith.constant 0 : index
    %c0_10 = arith.constant 0 : index
    %c0_11 = arith.constant 0 : index
    %18 = vector.load %arg3[%c0_9, %c0_10, %c0_11] : memref<1x8x1xf32, #tpu.memory_space<vmem>>, vector<1x8x1xf32>
    %19 = vector.shape_cast %18 : vector<1x8x1xf32> to vector<8x1xf32>
    %20 = arith.mulf %17, %19 : vector<8x1xf32>
    %21 = vector.broadcast %20 : vector<8x1xf32> to vector<8x256xf32>
    %22 = arith.mulf %9, %21 : vector<8x256xf32>
    %c0_12 = arith.constant 0 : index
    %c0_13 = arith.constant 0 : index
    %c0_14 = arith.constant 0 : index
    %23 = vector.load %arg4[%c0_12, %c0_13, %c0_14] : memref<1x8x1xf32, #tpu.memory_space<vmem>>, vector<1x8x1xf32>
    %24 = vector.shape_cast %23 : vector<1x8x1xf32> to vector<8x1xf32>
    %25 = vector.broadcast %24 : vector<8x1xf32> to vector<8x256xf32>
    %26 = arith.addf %22, %25 : vector<8x256xf32>
    %cst_15 = arith.constant 0.000000e+00 : f32
    %27 = vector.broadcast %cst_15 : f32 to vector<8x256xf32>
    %28 = arith.cmpf oge, %26, %27 : vector<8x256xf32>
    %cst_16 = arith.constant 0.00999999977 : f32
    %29 = vector.broadcast %cst_16 : f32 to vector<8x256xf32>
    %30 = arith.mulf %29, %26 : vector<8x256xf32>
    %31 = arith.select %28, %26, %30 : vector<8x256xi1>, vector<8x256xf32>
    %32 = vector.shape_cast %31 : vector<8x256xf32> to vector<1x8x256xf32>
    %c0_17 = arith.constant 0 : index
    %c0_18 = arith.constant 0 : index
    %c0_19 = arith.constant 0 : index
    %33 = vector.load %arg5[%c0_17, %c0_18, %c0_19] : memref<1x8x256xf32, #tpu.memory_space<vmem>>, vector<1x8x256xf32>
    tpu.vector_store %arg5[%c0_17, %c0_18, %c0_19], %32 {strides = array<i32>} : memref<1x8x256xf32, #tpu.memory_space<vmem>>, vector<1x8x256xf32>,
    return
  }
  func.func @transform_0(%arg0: i32) -> (i32, i32, i32) {
    %c0_i32 = arith.constant 0 : i32
    %c0_i32_0 = arith.constant 0 : i32
    %c0_i32_1 = arith.constant 0 : i32
    return %arg0, %c0_i32, %c0_i32_0 : i32, i32, i32
  }
  func.func @transform_1(%arg0: i32) -> (i32, i32) {
    %c0_i32 = arith.constant 0 : i32
    %c0_i32_0 = arith.constant 0 : i32
    %c0_i32_1 = arith.constant 0 : i32
    return %c0_i32, %c0_i32_0 : i32, i32
  }
  func.func @transform_2(%arg0: i32) -> (i32, i32, i32) {
    %c0_i32 = arith.constant 0 : i32
    %c0_i32_0 = arith.constant 0 : i32
    %c0_i32_1 = arith.constant 0 : i32
    return %arg0, %c0_i32, %c0_i32_0 : i32, i32, i32
  }
  func.func @transform_3(%arg0: i32) -> (i32, i32, i32) {
    %c0_i32 = arith.constant 0 : i32
    %c0_i32_0 = arith.constant 0 : i32
    %c0_i32_1 = arith.constant 0 : i32
    return %arg0, %c0_i32, %c0_i32_0 : i32, i32, i32
  }
  func.func @transform_4(%arg0: i32) -> (i32, i32, i32) {
    %c0_i32 = arith.constant 0 : i32
    %c0_i32_0 = arith.constant 0 : i32
    %c0_i32_1 = arith.constant 0 : i32
    return %arg0, %c0_i32, %c0_i32_0 : i32, i32, i32
  }
}

</mosaic_0001>

<llo_original>
// kernel: tpu_custom_call.1
$region0: #{tpu_custom_call.1}
  #allocation0 [shape = 'u32[]', space=smem, size = 0x4, offset = 0x4, fixed_abs, tag = 'smem constant byte address 0x4 - core index']
  #allocation1 [shape = 'u32[144,128]{1,0:T(1,128)}', space=vmem, size = 0x12000, scoped, tag = 'internal scratch']
  %s0 = inlined_call_operand.vmem [shape: f32[2,36,256], index: 0, kind: input, shape index: {}]
  %s1 = inlined_call_operand.vmem [shape: f32[8,36], index: 1, kind: input, shape index: {}]
  %s2 = inlined_call_operand.vmem [shape: f32[2,8,1], index: 2, kind: input, shape index: {}]
  %s3 = inlined_call_operand.vmem [shape: f32[2,8,1], index: 3, kind: input, shape index: {}]
  %s4 = inlined_call_operand.hbm [shape: f32[2,8,256], index: 4, kind: output, shape index: {}]
  %s5 = sld [smem:[#allocation0]]
  $region49: #{tpu_custom_call.1} parent=0
    _
  %s7 = ssub.s32 1, %s5
  %s8 = scalar_select 0, %s7, %s5
  $region1: #{tpu_custom_call.1} parent=0
    #allocation2 [shape = 'u8[16384]{0}', space=vmem, size = 0x4000, scoped, tag = 'output window, operand 0']
    #allocation3 [shape = 's32[2]{0}', space=sflag, size = 0x8, scoped, tag = 'scoped memory for tpu_custom_call.1']
    %9 = vsyncpa [#allocation3], 0
    %s10 = scalar_lea.sflag [#allocation3], 1
    %11 = vsyncpa %s10, 0
    loop: start=0, step=1, limit=4
    $region2: #{tpu_custom_call.1} parent=1 // loop_pre_header
      _
    $region3: #{tpu_custom_call.1} parent=1 // loop_header
      %s13 = sphi 0, %s17
      %p14 = scmp.ge.s32.totalorder %s13, 4
      %s23 = sphi 0, %s25
      %s26 = sphi 0, %s23
      %s27 = sphi 0, %s26
      %s43 = sphi 0, %s27
      %s47 = sphi 0, %s47
      %s49 = sphi 0, %s47
      %s50 = sphi 0, %s49
      %s64 = sphi 0, %s50
      %s70 = sphi 0, %s72
      %s73 = sphi 0, %s70
      %s74 = sphi 0, %s73
      %s90 = sphi 0, %s74
      %s96 = sphi 0, %s98
      %s99 = sphi 0, %s96
      %s100 = sphi 0, %s99
      %s116 = sphi 0, %s100
      %s122 = sphi 0, %s124
      %s125 = sphi 0, %s122
      %s126 = sphi 0, %s125
      %s142 = sphi 0, %s126
    $region4: #{tpu_custom_call.1} parent=1 // loop_header_branch
      %16 = sbr.rel (%p14) target = $region8
    $region5: #{tpu_custom_call.1} parent=1 // loop_body
      %s18 = ssub.s32 %s13, 1
      %s19 = ssub.s32 %s13, 2
      %s20 = sadd.s32 %s13, 1
      %s21 = ssub.s32 %s13, %s20
      %p22 = scmp.eq.s32.totalorder %s21, 0
      %s24 = sadd.s32 %s23, 1
      %s25 = scalar_select %p22, %s23, %s24
      %p28 = pneg %p22
      %p29 = scmp.eq.s32.totalorder %s13, 1
      %p30 = por %p28, %p29
      %p31 = scmp.ne.s32.totalorder %s23, %s26
      %p32 = scmp.eq.s32.totalorder %s13, 0
      %p33 = por %p31, %p32
      %p34 = scmp.ne.s32.totalorder %s23, %s26
      %p35 = scmp.eq.s32.totalorder %s18, 1
      %p36 = por %p34, %p35
      %p37 = scmp.ne.s32.totalorder %s26, %s27
      %p38 = scmp.eq.s32.totalorder %s18, 0
      %p39 = por %p37, %p38
      %p40 = scmp.ne.s32.totalorder %s26, %s27
      %p41 = scmp.eq.s32.totalorder %s19, 1
      %p42 = por %p40, %p41
      %p44 = scmp.ne.s32.totalorder %s27, %s43
      %p45 = scmp.eq.s32.totalorder %s19, 0
      %p46 = por %p44, %p45
      %s48 = sadd.s32 %s47, 1
      %p51 = scmp.eq.s32.totalorder %s13, 1
      %p52 = scmp.ne.s32.totalorder %s47, %s49
      %p53 = scmp.eq.s32.totalorder %s13, 0
      %p54 = por %p52, %p53
      %p55 = scmp.ne.s32.totalorder %s47, %s49
      %p56 = scmp.eq.s32.totalorder %s18, 1
      %p57 = por %p55, %p56
      %p58 = scmp.ne.s32.totalorder %s49, %s50
      %p59 = scmp.eq.s32.totalorder %s18, 0
      %p60 = por %p58, %p59
      %p61 = scmp.ne.s32.totalorder %s49, %s50
      %p62 = scmp.eq.s32.totalorder %s19, 1
      %p63 = por %p61, %p62
      %p65 = scmp.ne.s32.totalorder %s50, %s64
      %p66 = scmp.eq.s32.totalorder %s19, 0
      %p67 = por %p65, %p66
      %s68 = ssub.s32 %s13, %s20
      %p69 = scmp.eq.s32.totalorder %s68, 0
      %s71 = sadd.s32 %s70, 1
      %s72 = scalar_select %p69, %s70, %s71
      %p75 = pneg %p69
      %p76 = scmp.eq.s32.totalorder %s13, 1
      %p77 = por %p75, %p76
      %p78 = scmp.ne.s32.totalorder %s70, %s73
      %p79 = scmp.eq.s32.totalorder %s13, 0
      %p80 = por %p78, %p79
      %p81 = scmp.ne.s32.totalorder %s70, %s73
      %p82 = scmp.eq.s32.totalorder %s18, 1
      %p83 = por %p81, %p82
      %p84 = scmp.ne.s32.totalorder %s73, %s74
      %p85 = scmp.eq.s32.totalorder %s18, 0
      %p86 = por %p84, %p85
      %p87 = scmp.ne.s32.totalorder %s73, %s74
      %p88 = scmp.eq.s32.totalorder %s19, 1
      %p89 = por %p87, %p88
      %p91 = scmp.ne.s32.totalorder %s74, %s90
      %p92 = scmp.eq.s32.totalorder %s19, 0
      %p93 = por %p91, %p92
      %s94 = ssub.s32 %s13, %s20
      %p95 = scmp.eq.s32.totalorder %s94, 0
      %s97 = sadd.s32 %s96, 1
      %s98 = scalar_select %p95, %s96, %s97
      %p101 = pneg %p95
      %p102 = scmp.eq.s32.totalorder %s13, 1
      %p103 = por %p101, %p102
      %p104 = scmp.ne.s32.totalorder %s96, %s99
      %p105 = scmp.eq.s32.totalorder %s13, 0
      %p106 = por %p104, %p105
      %p107 = scmp.ne.s32.totalorder %s96, %s99
      %p108 = scmp.eq.s32.totalorder %s18, 1
      %p109 = por %p107, %p108
      %p110 = scmp.ne.s32.totalorder %s99, %s100
      %p111 = scmp.eq.s32.totalorder %s18, 0
      %p112 = por %p110, %p111
      %p113 = scmp.ne.s32.totalorder %s99, %s100
      %p114 = scmp.eq.s32.totalorder %s19, 1
      %p115 = por %p113, %p114
      %p117 = scmp.ne.s32.totalorder %s100, %s116
      %p118 = scmp.eq.s32.totalorder %s19, 0
      %p119 = por %p117, %p118
      %s120 = ssub.s32 %s13, %s20
      %p121 = scmp.eq.s32.totalorder %s120, 0
      %s123 = sadd.s32 %s122, 1
      %s124 = scalar_select %p121, %s122, %s123
      %p127 = pneg %p121
      %p128 = scmp.eq.s32.totalorder %s13, 1
      %p129 = por %p127, %p128
      %p130 = scmp.ne.s32.totalorder %s122, %s125
      %p131 = scmp.eq.s32.totalorder %s13, 0
      %p132 = por %p130, %p131
      %p133 = scmp.ne.s32.totalorder %s122, %s125
      %p134 = scmp.eq.s32.totalorder %s18, 1
      %p135 = por %p133, %p134
      %p136 = scmp.ne.s32.totalorder %s125, %s126
      %p137 = scmp.eq.s32.totalorder %s18, 0
      %p138 = por %p136, %p137
      %p139 = scmp.ne.s32.totalorder %s125, %s126
      %p140 = scmp.eq.s32.totalorder %s19, 1
      %p141 = por %p139, %p140
      %p143 = scmp.ne.s32.totalorder %s126, %s142
      %p144 = scmp.eq.s32.totalorder %s19, 0
      %p145 = por %p143, %p144
      %p146 = scmp.le.s32.totalorder 1, %s13
      %p147 = scmp.lt.s32.totalorder %s13, 3
      %p148 = pnand %p146, %p147
      %p149 = pneg %p148
      // Predicated region
      $region9: #{tpu_custom_call.1} parent=5 // pred_check
        _
      $region10: #{tpu_custom_call.1} parent=5 // pred_check_branch
        %151 = sbr.rel (%p148) target = $region12
      $region11: #{tpu_custom_call.1} parent=5 // pred_region
        %s152 = ssub.s32 %s13, 1
        // Predicated region
        $region13: #{tpu_custom_call.1} parent=11 // pred_check
          %p153 = pneg %p60
        $region14: #{tpu_custom_call.1} parent=11 // pred_check_branch
          %155 = sbr.rel (%p153) target = $region16
        $region15: #{tpu_custom_call.1} parent=11 // pred_region
          _
        $region16: #{tpu_custom_call.1} parent=11 // pred_fallthru
          _
      $region12: #{tpu_custom_call.1} parent=5 // pred_fallthru
        _
      %p156 = scmp.lt.s32.totalorder %s13, 2
      // Predicated region
      $region17: #{tpu_custom_call.1} parent=5 // pred_check
        %p157 = pneg %p156
      $region18: #{tpu_custom_call.1} parent=5 // pred_check_branch
        %159 = sbr.rel (%p157) target = $region20
      $region19: #{tpu_custom_call.1} parent=5 // pred_region
        // Predicated region
        $region21: #{tpu_custom_call.1} parent=19 // pred_check
          %p160 = pneg %p33
        $region22: #{tpu_custom_call.1} parent=19 // pred_check_branch
          %162 = sbr.rel (%p160) target = $region24
        $region23: #{tpu_custom_call.1} parent=19 // pred_region
          %p163 = scmp.lt.s32.totalorder %s13, 1
          %s164 = scalar_select %p163, %s13, 1
          %s165 = smul.addr %s164, 10
          %s166 = smul.addr %s165, 8
          %s167 = scalar_lea.vmem %s0, %s166
        $region24: #{tpu_custom_call.1} parent=19 // pred_fallthru
          _
        // Predicated region
        $region25: #{tpu_custom_call.1} parent=19 // pred_check
          %p168 = pneg %p80
        $region26: #{tpu_custom_call.1} parent=19 // pred_check_branch
          %170 = sbr.rel (%p168) target = $region28
        $region27: #{tpu_custom_call.1} parent=19 // pred_region
          %p171 = scmp.lt.s32.totalorder %s13, 1
          %s172 = scalar_select %p171, %s13, 1
          %s173 = smul.addr %s172, 8
          %s174 = scalar_lea.vmem %s2, %s173
        $region28: #{tpu_custom_call.1} parent=19 // pred_fallthru
          _
        // Predicated region
        $region29: #{tpu_custom_call.1} parent=19 // pred_check
          %p175 = pneg %p106
        $region30: #{tpu_custom_call.1} parent=19 // pred_check_branch
          %177 = sbr.rel (%p175) target = $region32
        $region31: #{tpu_custom_call.1} parent=19 // pred_region
          %p178 = scmp.lt.s32.totalorder %s13, 1
          %s179 = scalar_select %p178, %s13, 1
          %s180 = smul.addr %s179, 8
          %s181 = scalar_lea.vmem %s3, %s180
        $region32: #{tpu_custom_call.1} parent=19 // pred_fallthru
          _
      $region20: #{tpu_custom_call.1} parent=5 // pred_fallthru
        _
      %p182 = scmp.le.s32.totalorder 1, %s13
      %p183 = scmp.lt.s32.totalorder %s13, 3
      %p184 = pnand %p182, %p183
      %p185 = pneg %p184
      // Predicated region
      $region33: #{tpu_custom_call.1} parent=5 // pred_check
        _
      $region34: #{tpu_custom_call.1} parent=5 // pred_check_branch
        %187 = sbr.rel (%p184) target = $region36
      $region35: #{tpu_custom_call.1} parent=5 // pred_region
        %s188 = ssub.s32 %s13, 1
        %p189 = scmp.lt.s32.totalorder %s18, 1
        %s190 = scalar_select %p189, %s18, 1
        %s191 = smul.addr %s190, 10
        %s192 = smul.addr %s191, 8
        %s193 = scalar_lea.vmem %s0, %s192
        %p194 = pneg %p39
        %p195 = pneg %p36
        %p196 = pneg %p60
        %p197 = pneg %p57
        %p198 = scmp.lt.s32.totalorder %s18, 1
        %s199 = scalar_select %p198, %s18, 1
        %s200 = smul.addr %s199, 8
        %s201 = scalar_lea.vmem %s2, %s200
        %p202 = pneg %p86
        %p203 = pneg %p83
        %p204 = scmp.lt.s32.totalorder %s18, 1
        %s205 = scalar_select %p204, %s18, 1
        %s206 = smul.addr %s205, 8
        %s207 = scalar_lea.vmem %s3, %s206
        %p208 = pneg %p112
        %p209 = pneg %p109
        %p210 = pneg %p138
        %p211 = pneg %p135
        %s212 = sand.u32 %s125, 1
        %s213 = scalar_lea.sflag [#allocation3], %s212
        %s214 = sand.u32 %s125, 1
        %s215 = smul.addr %s214, 16
        %s216 = scalar_lea.vmem [#allocation2], %s215
        %p217 = scmp.lt.s32.totalorder %s18, 1
        %s218 = scalar_select %p217, %s18, 1
        %s219 = smul.addr %s218, 10
        %s220 = smul.addr %s219, 8
        %s221 = scalar_lea.vmem %s0, %s220
        %p222 = scmp.lt.s32.totalorder %s18, 1
        %s223 = scalar_select %p222, %s18, 1
        %s224 = smul.addr %s223, 8
        %s225 = scalar_lea.vmem %s2, %s224
        %p226 = scmp.lt.s32.totalorder %s18, 1
        %s227 = scalar_select %p226, %s18, 1
        %s228 = smul.addr %s227, 8
        %s229 = scalar_lea.vmem %s3, %s228
        %v230 = vld [vmem:[%s1] sm:$0xff]
        %v231 = vld [vmem:[%s221] sm:$0xff]
        %v232 = vld [vmem:[%s221 + $0x8] sm:$0xff]
        %v233 = vld [vmem:[%s221 + $0x10] sm:$0xff]
        %v234 = vld [vmem:[%s221 + $0x18] sm:$0xff]
        %v235 = vld [vmem:[%s221 + $0x20] sm:$0xff]
        %v236 = vld [vmem:[%s221 + $0x28] sm:$0xff]
        %v237 = vld [vmem:[%s221 + $0x30] sm:$0xff]
        %v238 = vld [vmem:[%s221 + $0x38] sm:$0xff]
        %v239 = vld [vmem:[%s221 + $0x40] sm:$0xf]
        %v240 = vld [vmem:[%s221 + $0x48] sm:$0xf]
        %vm241 = vcmask 293888
        %v243 = vsel %vm241, %v230, 0
        %vm245 = vcmask 1043456
        %v247 = vsel %vm245, %v239, 0
        %v250 = vsel %vm245, %v240, 0
        %252 = vmatprep.subr.mxu0 %v232
        %253 = vmatpush1.msra.mxu0 %v231
        %254 = vmatprep.subr.mxu0 %v234
        %255 = vmatpush1.msra.mxu0 %v233
        %256 = vmatprep.subr.mxu0 %v236
        %257 = vmatpush1.msra.mxu0 %v235
        %258 = vmatprep.subr.mxu0 %v238
        %259 = vmatpush1.msra.mxu0 %v237
        %260 = vmatprep.subr.mxu0 %v250
        %261 = vmatpush1.msra.mxu0 %v247
        %262 = vmatprep.subr.mxu0 0.0
        %263 = vmatpush1.msra.mxu0 0.0
        %264 = vmatprep.subr.mxu0 0.0
        %265 = vmatpush1.msra.mxu0 0.0
        %266 = vmatprep.subr.mxu0 0.0
        %267 = vmatpush1.msra.mxu0 0.0
        %268 = vmatprep.subr.mxu0 0.0
        %269 = vmatpush1.msra.mxu0 0.0
        %270 = vmatprep.subr.mxu0 0.0
        %271 = vmatpush1.msra.mxu0 0.0
        %272 = vmatprep.subr.mxu0 0.0
        %273 = vmatpush1.msra.mxu0 0.0
        %274 = vmatprep.subr.mxu0 0.0
        %275 = vmatpush1.msra.mxu0 0.0
        %276 = vmatprep.subr.mxu0 0.0
        %277 = vmatpush1.msra.mxu0 0.0
        %278 = vmatprep.subr.mxu0 0.0
        %279 = vmatpush1.msra.mxu0 0.0
        %280 = vmatprep.subr.mxu0 0.0
        %281 = vmatpush1.msra.mxu0 0.0
        %282 = vmatprep.subr.mxu0 0.0
        %283 = vmatpush1.msra.mxu0 0.0
        %284 = vmatprep.subr.mxu0 0.0
        %285 = vmatpush1.msra.mxu0 0.0
        %286 = vmatprep.subr.mxu0 0.0
        %287 = vmatpush1.msra.mxu0 0.0
        %288 = vmatprep.subr.mxu0 0.0
        %289 = vmatpush1.msra.mxu0 0.0
        %290 = vmatprep.subr.mxu0 0.0
        %291 = vmatpush1.msra.mxu0 0.0
        %292 = vmatprep.subr.mxu0 0.0
        %293 = vmatpush1.msra.mxu0 0.0
        %294 = vmatprep.subr.mxu0 0.0
        %295 = vmatpush1.msra.mxu0 0.0
        %296 = vmatprep.subr.mxu0 0.0
        %297 = vmatpush1.msra.mxu0 0.0
        %298 = vmatprep.subr.mxu0 0.0
        %299 = vmatpush1.msra.mxu0 0.0
        %300 = vmatprep.subr.mxu0 0.0
        %301 = vmatpush1.msra.mxu0 0.0
        %302 = vmatprep.subr.mxu0 0.0
        %303 = vmatpush1.msra.mxu0 0.0
        %304 = vmatprep.subr.mxu0 0.0
        %305 = vmatpush1.msra.mxu0 0.0
        %306 = vmatprep.subr.mxu0 0.0
        %307 = vmatpush1.msra.mxu0 0.0
        %308 = vmatprep.subr.mxu0 0.0
        %309 = vmatpush1.msra.mxu0 0.0
        %310 = vmatprep.subr.mxu0 0.0
        %311 = vmatpush1.msra.mxu0 0.0
        %312 = vmatprep.subr.mxu0 0.0
        %313 = vmatpush1.msra.mxu0 0.0
        %314 = vmatprep.subr.mxu0 0.0
        %315 = vmatpush1.msra.mxu0 0.0
        %316 = vmatprep.mubr.f32.mxu0 0.0
        %317 = vmatmul.mubr.f32.gmra.mrb[0].mxu0 %v243
        %v318 = vpop.f32.mrb[0].mxu0
        %v319 = vadd.f32 0.0, %v318
        %v320 = vpop.f32.mrb[0].mxu0
        %v321 = vadd.f32 0.0, %v320
        %322 = vdwg.mxu0
        %v323 = vadd.f32 %v319, %v321
        %324 = vadd.xlane.f32.xlu0 %v323
        %v325 = vpop.xlane.xlu0 %324
        %v326 = vrcp.pop 256.0
        %v327 = vmul.f32 %v325, %v326
        %v328 = vsub.f32 %v319, %v327
        %v329 = vsub.f32 %v321, %v327
        %v330 = vmul.f32 %v328, %v328
        %v331 = vmul.f32 %v329, %v329
        %v332 = vadd.f32 %v330, %v331
        %333 = vadd.xlane.f32.xlu0 %v332
        %v334 = vpop.xlane.xlu0 %333
        %v335 = vmul.f32 %v334, %v326
        %v336 = vadd.f32 %v335, 1e-05
        %v337 = vrsqrt.pop %v336
        %v338 = vld [vmem:[%s225] sm:$0xff]
        %v339 = vmul.f32 %v337, %v338
        %341 = vset.pattern.permute.xlu0 0
        %342 = vperm.xlu0 %341, %v339
        %v343 = vpop.permute.xlu0 %342
        %v345 = vmul.f32 %v328, %v343
        %v346 = vmul.f32 %v329, %v343
        %v347 = vld [vmem:[%s229] sm:$0xff]
        %349 = vset.pattern.permute.xlu0 0
        %350 = vperm.xlu0 %349, %v347
        %v351 = vpop.permute.xlu0 %350
        %v353 = vadd.f32 %v345, %v351
        %v354 = vadd.f32 %v346, %v351
        %vm355 = vcmp.ge.f32.partialorder %v353, 0.0
        %vm356 = vcmp.ge.f32.partialorder %v354, 0.0
        %v357 = vmul.f32 %v353, 0.01
        %v358 = vmul.f32 %v354, 0.01
        %v359 = vsel %vm355, %v353, %v357
        %v360 = vsel %vm356, %v354, %v358
        %361 = vst [vmem:[%s216] sm:$0xff] %v359
        %362 = vst [vmem:[%s216 + $0x8] sm:$0xff] %v360
        %s363 = sand.u32 %s125, 1
        %s364 = scalar_lea.sflag [#allocation3], %s363
        %s365 = sand.u32 %s125, 1
        %s366 = smul.addr %s365, 16
        %s367 = scalar_lea.vmem [#allocation2], %s366
        // Predicated region
        $region37: #{tpu_custom_call.1} parent=35 // pred_check
          %p368 = pneg %p135
        $region38: #{tpu_custom_call.1} parent=35 // pred_check_branch
          %370 = sbr.rel (%p368) target = $region40
        $region39: #{tpu_custom_call.1} parent=35 // pred_region
          %s372 = ssub.s32 256, 256
          %373 = vsyncadd %s364, %s372
          %s374 = smul.addr %s18, 2
          %s375 = smul.addr %s374, 128
          %s376 = scalar_lea.hbm %s4, %s375
          %s378 = sshll.u32 %s367, 4
          %s379 = int_to_ptr.vmem [resolvable:$true] %s378
          %381 = dma.vmem_to_hbm [thread:$0]  %s379, 256, %s376, %s364
        $region40: #{tpu_custom_call.1} parent=35 // pred_fallthru
          _
      $region36: #{tpu_custom_call.1} parent=5 // pred_fallthru
        _
      %p382 = scmp.le.s32.totalorder 2, %s13
      // Predicated region
      $region41: #{tpu_custom_call.1} parent=5 // pred_check
        %p383 = pneg %p382
      $region42: #{tpu_custom_call.1} parent=5 // pred_check_branch
        %385 = sbr.rel (%p383) target = $region44
      $region43: #{tpu_custom_call.1} parent=5 // pred_region
        %s386 = ssub.s32 %s13, 2
        // Predicated region
        $region45: #{tpu_custom_call.1} parent=43 // pred_check
          %p387 = pneg %p141
        $region46: #{tpu_custom_call.1} parent=43 // pred_check_branch
          %389 = sbr.rel (%p387) target = $region48
        $region47: #{tpu_custom_call.1} parent=43 // pred_region
          %s390 = sand.u32 %s126, 1
          %s391 = scalar_lea.sflag [#allocation3], %s390
          %s392 = sand.u32 %s126, 1
          %s393 = smul.addr %s392, 16
          %s394 = scalar_lea.vmem [#allocation2], %s393
          %395 = dma.done %s391, 256
        $region48: #{tpu_custom_call.1} parent=43 // pred_fallthru
          _
      $region44: #{tpu_custom_call.1} parent=5 // pred_fallthru
        _
    $region6: #{tpu_custom_call.1} parent=1 // loop_footer
      %s17 = sadd.s32 1, %s13
    $region7: #{tpu_custom_call.1} parent=1 // loop_footer_branch
      %12 = sbr.rel target = $region3
    $region8: #{tpu_custom_call.1} parent=1 // loop_exit
      _
    %396 = vsyncpa [#allocation3], 1
    %s397 = scalar_lea.sflag [#allocation3], 1
    %398 = vsyncpa %s397, 1

</llo_original>
